<compile_context>
chip_gen: v7x
topology: tpu7x:2x2x1
jax: 0.10.0
libtpu: 0.0.40
codegen_flags: <defaults>
</compile_context>

<pallas_src>
import functools

import jax
import jax.numpy as jnp
from jax.experimental import pallas as pl
from jax.experimental.pallas import tpu as pltpu


def _embedding_classifier_kernel(ids_ref, table_ref, out_ref, *, B, S):
    """Fused embedding-gather + seq-mean + softmax.

    ids_ref:   (B*S,) int32 token ids, resident in SMEM (scalar prefetch).
    table_ref: (V, E)  f32 embedding table in VMEM.
    out_ref:   (B, E)  f32 softmax(mean_s(table[ids]), axis=-1).
    """
    V, E = table_ref.shape
    inv_s = jnp.float32(1.0 / S)

    # B and S are small compile-time constants here, so a static unroll of the
    # gather/accumulate loop is fine (16 tiny dynamic-slice loads + VPU adds).
    for b in range(B):
        acc = jnp.zeros((1, E), jnp.float32)
        for s in range(S):
            tok = ids_ref[b * S + s]                 # SMEM scalar read
            # Defensive clamp: PyTorch nn.Embedding would raise on an
            # out-of-range id; an unclamped dynamic slice here would read
            # undefined VMEM instead of failing loudly.
            tok = jnp.clip(tok, 0, V - 1)
            acc = acc + table_ref[pl.ds(tok, 1), :]  # (1, E) row gather
        avg = acc * inv_s                            # mean over the seq axis

        # Numerically stable softmax over the embedding axis (exact f32).
        m = jnp.max(avg, axis=-1, keepdims=True)
        e = jnp.exp(avg - m)
        out_ref[b:b + 1, :] = e / jnp.sum(e, axis=-1, keepdims=True)


def embedding_classifier(x, table):
    """x: (B, S) int token ids; table: (V, E) f32. Returns (B, E) f32."""
    B, S = x.shape
    V, E = table.shape
    ids = x.reshape(B * S).astype(jnp.int32)

    kernel = functools.partial(_embedding_classifier_kernel, B=B, S=S)
    return pl.pallas_call(
        kernel,
        out_shape=jax.ShapeDtypeStruct((B, E), jnp.float32),
        grid_spec=pltpu.PrefetchScalarGridSpec(
            num_scalar_prefetch=1,                    # ids -> SMEM, first kernel arg
            grid=(1,),                                # single program at toy sizes
            in_specs=[pl.BlockSpec((V, E), lambda i, ids_ref: (0, 0))],
            out_specs=pl.BlockSpec((B, E), lambda i, ids_ref: (0, 0)),
        ),
        compiler_params=pltpu.CompilerParams(
            dimension_semantics=("arbitrary",),
        ),
    )(ids, table)


def _reference(x, table):
    emb = table[x]                       # (B, S, E)
    avg = emb.mean(axis=1)               # (B, E)
    return jax.nn.softmax(avg, axis=-1)  # (B, E)


if __name__ == "__main__":
    vocab = {'good': 0, 'movie': 1, 'bad': 2, 'awesome': 3, 'film': 4,
             'terrible': 5, 'great': 6, 'awful': 7, 'excellent': 8, 'poor': 9,
             'fantastic': 10, 'horrible': 11, 'brilliant': 12, 'lousy': 13,
             'superb': 14, 'disappointing': 15, 'amazing': 16, 'dreadful': 17,
             'outstanding': 18, 'atrocious': 19, 'marvelous': 20}
    vocab_size = len(vocab)   # 21
    embed_dim = 2
    batch, seq = 2, 8

    key = jax.random.PRNGKey(0)
    k_emb, k_x = jax.random.split(key)

    # Deterministic parameter init (mimics nn.Embedding's N(0,1) weights).
    embedding_table = jax.random.normal(
        k_emb, (vocab_size, embed_dim), dtype=jnp.float32)

    # Deterministic example token ids, shape (batch, seq).
    x = jax.random.randint(k_x, (batch, seq), 0, vocab_size, dtype=jnp.int32)

    out = embedding_classifier(x, embedding_table)
    out = jax.block_until_ready(out)

    ref = _reference(x, embedding_table)
    assert out.shape == (batch, embed_dim)
    assert jnp.allclose(out, ref, atol=1e-5, rtol=1e-5)

    print("KERNEL_OK")
</pallas_src>

<mosaic_0001>
module attributes {stable_mosaic.version = 11 : i64} {
  func.func @_embedding_classifier_kernel(%arg0: i32, %arg1: memref<16xi32, #tpu.memory_space<smem>>, %arg2: memref<21x2xf32, #tpu.memory_space<vmem>>, %arg3: memref<2x2xf32, #tpu.memory_space<vmem>>) attributes {dimension_semantics = [#tpu.dimension_semantics<arbitrary>], iteration_bounds = array<i64: 1>, scalar_prefetch = 1 : i64, scratch_operands = 0 : i64, tpu.core_type = #tpu.core_type<tc>, window_params = [{pipeline_mode = #tpu.pipeline_mode<synchronous>, transform_indices = @transform_0, window_bounds = array<i64: 21, 2>}, {pipeline_mode = #tpu.pipeline_mode<synchronous>, transform_indices = @transform_1, window_bounds = array<i64: 2, 2>}]} {
    %cst = arith.constant 0.000000e+00 : f32
    %0 = vector.broadcast %cst : f32 to vector<1x2xf32>
    %c0 = arith.constant 0 : index
    %1 = memref.load %arg1[%c0] : memref<16xi32, #tpu.memory_space<smem>>
    %c0_i32 = arith.constant 0 : i32
    %c20_i32 = arith.constant 20 : i32
    %2 = arith.maxsi %c0_i32, %1 : i32
    %3 = arith.minsi %c20_i32, %2 : i32
    %4 = arith.index_cast %3 : i32 to index
    %c0_0 = arith.constant 0 : index
    %5 = vector.load %arg2[%4, %c0_0] : memref<21x2xf32, #tpu.memory_space<vmem>>, vector<1x2xf32>
    %6 = arith.addf %0, %5 : vector<1x2xf32>
    %c1 = arith.constant 1 : index
    %7 = memref.load %arg1[%c1] : memref<16xi32, #tpu.memory_space<smem>>
    %c0_i32_1 = arith.constant 0 : i32
    %c20_i32_2 = arith.constant 20 : i32
    %8 = arith.maxsi %c0_i32_1, %7 : i32
    %9 = arith.minsi %c20_i32_2, %8 : i32
    %10 = arith.index_cast %9 : i32 to index
    %c0_3 = arith.constant 0 : index
    %11 = vector.load %arg2[%10, %c0_3] : memref<21x2xf32, #tpu.memory_space<vmem>>, vector<1x2xf32>
    %12 = arith.addf %6, %11 : vector<1x2xf32>
    %c2 = arith.constant 2 : index
    %13 = memref.load %arg1[%c2] : memref<16xi32, #tpu.memory_space<smem>>
    %c0_i32_4 = arith.constant 0 : i32
    %c20_i32_5 = arith.constant 20 : i32
    %14 = arith.maxsi %c0_i32_4, %13 : i32
    %15 = arith.minsi %c20_i32_5, %14 : i32
    %16 = arith.index_cast %15 : i32 to index
    %c0_6 = arith.constant 0 : index
    %17 = vector.load %arg2[%16, %c0_6] : memref<21x2xf32, #tpu.memory_space<vmem>>, vector<1x2xf32>
    %18 = arith.addf %12, %17 : vector<1x2xf32>
    %c3 = arith.constant 3 : index
    %19 = memref.load %arg1[%c3] : memref<16xi32, #tpu.memory_space<smem>>
    %c0_i32_7 = arith.constant 0 : i32
    %c20_i32_8 = arith.constant 20 : i32
    %20 = arith.maxsi %c0_i32_7, %19 : i32
    %21 = arith.minsi %c20_i32_8, %20 : i32
    %22 = arith.index_cast %21 : i32 to index
    %c0_9 = arith.constant 0 : index
    %23 = vector.load %arg2[%22, %c0_9] : memref<21x2xf32, #tpu.memory_space<vmem>>, vector<1x2xf32>
    %24 = arith.addf %18, %23 : vector<1x2xf32>
    %c4 = arith.constant 4 : index
    %25 = memref.load %arg1[%c4] : memref<16xi32, #tpu.memory_space<smem>>
    %c0_i32_10 = arith.constant 0 : i32
    %c20_i32_11 = arith.constant 20 : i32
    %26 = arith.maxsi %c0_i32_10, %25 : i32
    %27 = arith.minsi %c20_i32_11, %26 : i32
    %28 = arith.index_cast %27 : i32 to index
    %c0_12 = arith.constant 0 : index
    %29 = vector.load %arg2[%28, %c0_12] : memref<21x2xf32, #tpu.memory_space<vmem>>, vector<1x2xf32>
    %30 = arith.addf %24, %29 : vector<1x2xf32>
    %c5 = arith.constant 5 : index
    %31 = memref.load %arg1[%c5] : memref<16xi32, #tpu.memory_space<smem>>
    %c0_i32_13 = arith.constant 0 : i32
    %c20_i32_14 = arith.constant 20 : i32
    %32 = arith.maxsi %c0_i32_13, %31 : i32
    %33 = arith.minsi %c20_i32_14, %32 : i32
    %34 = arith.index_cast %33 : i32 to index
    %c0_15 = arith.constant 0 : index
    %35 = vector.load %arg2[%34, %c0_15] : memref<21x2xf32, #tpu.memory_space<vmem>>, vector<1x2xf32>
    %36 = arith.addf %30, %35 : vector<1x2xf32>
    %c6 = arith.constant 6 : index
    %37 = memref.load %arg1[%c6] : memref<16xi32, #tpu.memory_space<smem>>
    %c0_i32_16 = arith.constant 0 : i32
    %c20_i32_17 = arith.constant 20 : i32
    %38 = arith.maxsi %c0_i32_16, %37 : i32
    %39 = arith.minsi %c20_i32_17, %38 : i32
    %40 = arith.index_cast %39 : i32 to index
    %c0_18 = arith.constant 0 : index
    %41 = vector.load %arg2[%40, %c0_18] : memref<21x2xf32, #tpu.memory_space<vmem>>, vector<1x2xf32>
    %42 = arith.addf %36, %41 : vector<1x2xf32>
    %c7 = arith.constant 7 : index
    %43 = memref.load %arg1[%c7] : memref<16xi32, #tpu.memory_space<smem>>
    %c0_i32_19 = arith.constant 0 : i32
    %c20_i32_20 = arith.constant 20 : i32
    %44 = arith.maxsi %c0_i32_19, %43 : i32
    %45 = arith.minsi %c20_i32_20, %44 : i32
    %46 = arith.index_cast %45 : i32 to index
    %c0_21 = arith.constant 0 : index
    %47 = vector.load %arg2[%46, %c0_21] : memref<21x2xf32, #tpu.memory_space<vmem>>, vector<1x2xf32>
    %48 = arith.addf %42, %47 : vector<1x2xf32>
    %cst_22 = arith.constant 1.250000e-01 : f32
    %49 = vector.broadcast %cst_22 : f32 to vector<1x2xf32>
    %50 = arith.mulf %48, %49 : vector<1x2xf32>
    %cst_23 = arith.constant dense<0xFF800000> : vector<1xf32>
    %51 = vector.multi_reduction <maximumf>, %50, %cst_23 [1] : vector<1x2xf32> to vector<1xf32>
    %52 = vector.shape_cast %51 : vector<1xf32> to vector<1x1xf32>
    %53 = vector.broadcast %52 : vector<1x1xf32> to vector<1x2xf32>
    %54 = arith.subf %50, %53 : vector<1x2xf32>
    %55 = math.exp %54 : vector<1x2xf32>
    %cst_24 = arith.constant dense<0.000000e+00> : vector<1xf32>
    %56 = vector.multi_reduction <add>, %55, %cst_24 [1] : vector<1x2xf32> to vector<1xf32>
    %57 = vector.shape_cast %56 : vector<1xf32> to vector<1x1xf32>
    %58 = vector.broadcast %57 : vector<1x1xf32> to vector<1x2xf32>
    %59 = arith.divf %55, %58 : vector<1x2xf32>
    %c0_25 = arith.constant 0 : index
    %c0_26 = arith.constant 0 : index
    %60 = vector.load %arg3[%c0_25, %c0_26] : memref<2x2xf32, #tpu.memory_space<vmem>>, vector<1x2xf32>
    tpu.vector_store %arg3[%c0_25, %c0_26], %59 {strides = array<i32>} : memref<2x2xf32, #tpu.memory_space<vmem>>, vector<1x2xf32>,
    %cst_27 = arith.constant 0.000000e+00 : f32
    %61 = vector.broadcast %cst_27 : f32 to vector<1x2xf32>
    %c8 = arith.constant 8 : index
    %62 = memref.load %arg1[%c8] : memref<16xi32, #tpu.memory_space<smem>>
    %c0_i32_28 = arith.constant 0 : i32
    %c20_i32_29 = arith.constant 20 : i32
    %63 = arith.maxsi %c0_i32_28, %62 : i32
    %64 = arith.minsi %c20_i32_29, %63 : i32
    %65 = arith.index_cast %64 : i32 to index
    %c0_30 = arith.constant 0 : index
    %66 = vector.load %arg2[%65, %c0_30] : memref<21x2xf32, #tpu.memory_space<vmem>>, vector<1x2xf32>
    %67 = arith.addf %61, %66 : vector<1x2xf32>
    %c9 = arith.constant 9 : index
    %68 = memref.load %arg1[%c9] : memref<16xi32, #tpu.memory_space<smem>>
    %c0_i32_31 = arith.constant 0 : i32
    %c20_i32_32 = arith.constant 20 : i32
    %69 = arith.maxsi %c0_i32_31, %68 : i32
    %70 = arith.minsi %c20_i32_32, %69 : i32
    %71 = arith.index_cast %70 : i32 to index
    %c0_33 = arith.constant 0 : index
    %72 = vector.load %arg2[%71, %c0_33] : memref<21x2xf32, #tpu.memory_space<vmem>>, vector<1x2xf32>
    %73 = arith.addf %67, %72 : vector<1x2xf32>
    %c10 = arith.constant 10 : index
    %74 = memref.load %arg1[%c10] : memref<16xi32, #tpu.memory_space<smem>>
    %c0_i32_34 = arith.constant 0 : i32
    %c20_i32_35 = arith.constant 20 : i32
    %75 = arith.maxsi %c0_i32_34, %74 : i32
    %76 = arith.minsi %c20_i32_35, %75 : i32
    %77 = arith.index_cast %76 : i32 to index
    %c0_36 = arith.constant 0 : index
    %78 = vector.load %arg2[%77, %c0_36] : memref<21x2xf32, #tpu.memory_space<vmem>>, vector<1x2xf32>
    %79 = arith.addf %73, %78 : vector<1x2xf32>
    %c11 = arith.constant 11 : index
    %80 = memref.load %arg1[%c11] : memref<16xi32, #tpu.memory_space<smem>>
    %c0_i32_37 = arith.constant 0 : i32
    %c20_i32_38 = arith.constant 20 : i32
    %81 = arith.maxsi %c0_i32_37, %80 : i32
    %82 = arith.minsi %c20_i32_38, %81 : i32
    %83 = arith.index_cast %82 : i32 to index
    %c0_39 = arith.constant 0 : index
    %84 = vector.load %arg2[%83, %c0_39] : memref<21x2xf32, #tpu.memory_space<vmem>>, vector<1x2xf32>
    %85 = arith.addf %79, %84 : vector<1x2xf32>
    %c12 = arith.constant 12 : index
    %86 = memref.load %arg1[%c12] : memref<16xi32, #tpu.memory_space<smem>>
    %c0_i32_40 = arith.constant 0 : i32
    %c20_i32_41 = arith.constant 20 : i32
    %87 = arith.maxsi %c0_i32_40, %86 : i32
    %88 = arith.minsi %c20_i32_41, %87 : i32
    %89 = arith.index_cast %88 : i32 to index
    %c0_42 = arith.constant 0 : index
    %90 = vector.load %arg2[%89, %c0_42] : memref<21x2xf32, #tpu.memory_space<vmem>>, vector<1x2xf32>
    %91 = arith.addf %85, %90 : vector<1x2xf32>
    %c13 = arith.constant 13 : index
    %92 = memref.load %arg1[%c13] : memref<16xi32, #tpu.memory_space<smem>>
    %c0_i32_43 = arith.constant 0 : i32
    %c20_i32_44 = arith.constant 20 : i32
    %93 = arith.maxsi %c0_i32_43, %92 : i32
    %94 = arith.minsi %c20_i32_44, %93 : i32
    %95 = arith.index_cast %94 : i32 to index
    %c0_45 = arith.constant 0 : index
    %96 = vector.load %arg2[%95, %c0_45] : memref<21x2xf32, #tpu.memory_space<vmem>>, vector<1x2xf32>
    %97 = arith.addf %91, %96 : vector<1x2xf32>
    %c14 = arith.constant 14 : index
    %98 = memref.load %arg1[%c14] : memref<16xi32, #tpu.memory_space<smem>>
    %c0_i32_46 = arith.constant 0 : i32
    %c20_i32_47 = arith.constant 20 : i32
    %99 = arith.maxsi %c0_i32_46, %98 : i32
    %100 = arith.minsi %c20_i32_47, %99 : i32
    %101 = arith.index_cast %100 : i32 to index
    %c0_48 = arith.constant 0 : index
    %102 = vector.load %arg2[%101, %c0_48] : memref<21x2xf32, #tpu.memory_space<vmem>>, vector<1x2xf32>
    %103 = arith.addf %97, %102 : vector<1x2xf32>
    %c15 = arith.constant 15 : index
    %104 = memref.load %arg1[%c15] : memref<16xi32, #tpu.memory_space<smem>>
    %c0_i32_49 = arith.constant 0 : i32
    %c20_i32_50 = arith.constant 20 : i32
    %105 = arith.maxsi %c0_i32_49, %104 : i32
    %106 = arith.minsi %c20_i32_50, %105 : i32
    %107 = arith.index_cast %106 : i32 to index
    %c0_51 = arith.constant 0 : index
    %108 = vector.load %arg2[%107, %c0_51] : memref<21x2xf32, #tpu.memory_space<vmem>>, vector<1x2xf32>
    %109 = arith.addf %103, %108 : vector<1x2xf32>
    %cst_52 = arith.constant 1.250000e-01 : f32
    %110 = vector.broadcast %cst_52 : f32 to vector<1x2xf32>
    %111 = arith.mulf %109, %110 : vector<1x2xf32>
    %cst_53 = arith.constant dense<0xFF800000> : vector<1xf32>
    %112 = vector.multi_reduction <maximumf>, %111, %cst_53 [1] : vector<1x2xf32> to vector<1xf32>
    %113 = vector.shape_cast %112 : vector<1xf32> to vector<1x1xf32>
    %114 = vector.broadcast %113 : vector<1x1xf32> to vector<1x2xf32>
    %115 = arith.subf %111, %114 : vector<1x2xf32>
    %116 = math.exp %115 : vector<1x2xf32>
    %cst_54 = arith.constant dense<0.000000e+00> : vector<1xf32>
    %117 = vector.multi_reduction <add>, %116, %cst_54 [1] : vector<1x2xf32> to vector<1xf32>
    %118 = vector.shape_cast %117 : vector<1xf32> to vector<1x1xf32>
    %119 = vector.broadcast %118 : vector<1x1xf32> to vector<1x2xf32>
    %120 = arith.divf %116, %119 : vector<1x2xf32>
    %c1_55 = arith.constant 1 : index
    %c0_56 = arith.constant 0 : index
    %121 = vector.load %arg3[%c1_55, %c0_56] : memref<2x2xf32, #tpu.memory_space<vmem>>, vector<1x2xf32>
    tpu.vector_store %arg3[%c1_55, %c0_56], %120 {strides = array<i32>} : memref<2x2xf32, #tpu.memory_space<vmem>>, vector<1x2xf32>,
    return
  }
  func.func @transform_0(%arg0: i32, %arg1: memref<16xi32, #tpu.memory_space<smem>>) -> (i32, i32) {
    %c0_i32 = arith.constant 0 : i32
    %c0_i32_0 = arith.constant 0 : i32
    %c0_i32_1 = arith.constant 0 : i32
    return %c0_i32, %c0_i32_0 : i32, i32
  }
  func.func @transform_1(%arg0: i32, %arg1: memref<16xi32, #tpu.memory_space<smem>>) -> (i32, i32) {
    %c0_i32 = arith.constant 0 : i32
    %c0_i32_0 = arith.constant 0 : i32
    %c0_i32_1 = arith.constant 0 : i32
    return %c0_i32, %c0_i32_0 : i32, i32
  }
}

</mosaic_0001>

<llo_original>
// kernel: tpu_custom_call.1
$region0: #{tpu_custom_call.1}
  #allocation0 [shape = 'u32[]', space=smem, size = 0x4, offset = 0x4, fixed_abs, tag = 'smem constant byte address 0x4 - core index']
  #allocation1 [shape = 'u32[144,128]{1,0:T(1,128)}', space=vmem, size = 0x12000, scoped, tag = 'internal scratch']
  #allocation2 [shape = 's32[1]{0}', space=sflag, size = 0x4, scoped, tag = 'scoped memory for tpu_custom_call.1']
  #allocation3 [shape = 'u8[512]{0}', space=smem, size = 0x200, scoped, tag = 'prefetched SMEM operand 0']
  %s0 = inlined_call_operand.vmem [shape: s32[16], index: 0, kind: input, shape index: {}]
  %s1 = inlined_call_operand.vmem [shape: f32[21,2], index: 1, kind: input, shape index: {}]
  %s2 = inlined_call_operand.hbm [shape: f32[2,2], index: 2, kind: output, shape index: {}]
  %s3 = sld [smem:[#allocation0]]
  $region14: #{tpu_custom_call.1} parent=0
    _
  %s5 = ssub.s32 1, %s3
  %s6 = scalar_select 0, %s5, %s3
  %s7 = sshll.u32 %s0, 4
  %s8 = int_to_ptr.vmem [resolvable:$true] %s7
  %10 = dma.vmem_to_smem %s8, 16, [#allocation3], [#allocation2]
  %11 = dma.done [#allocation2], 16
  %12 = sfence
  $region1: #{tpu_custom_call.1} parent=0
    #allocation4 [shape = 'u8[1024]{0}', space=vmem, size = 0x400, scoped, tag = 'output window, operand 0, single buffered']
    #allocation5 [shape = 's32[1]{0}', space=sflag, size = 0x4, scoped, tag = 'scoped memory for tpu_custom_call.1']
    %13 = vsyncpa [#allocation5], 0
    // Predicated region
    $region2: #{tpu_custom_call.1} parent=1 // pred_check
      _
    $region3: #{tpu_custom_call.1} parent=1 // pred_check_branch
      %15 = sbr.rel (0) target = $region5
    $region4: #{tpu_custom_call.1} parent=1 // pred_region
      _
    $region5: #{tpu_custom_call.1} parent=1 // pred_fallthru
      _
    %s16 = sld [smem:[#allocation3]]
    %p17 = scmp.gt.s32.totalorder %s16, 0
    %s18 = scalar_select %p17, %s16, 0
    %p19 = scmp.lt.s32.totalorder %s18, 20
    %s20 = scalar_select %p19, %s18, 20
    %s21 = scalar_lea.vmem %s1, %s20
    %v22 = vld [vmem:[%s21] sm:$0x1]
    %v23 = vadd.f32 %v22, 0.0
    %s24 = sld [smem:[#allocation3 + $0x1]]
    %p25 = scmp.gt.s32.totalorder %s24, 0
    %s26 = scalar_select %p25, %s24, 0
    %p27 = scmp.lt.s32.totalorder %s26, 20
    %s28 = scalar_select %p27, %s26, 20
    %s29 = scalar_lea.vmem %s1, %s28
    %v30 = vld [vmem:[%s29] sm:$0x1]
    %v31 = vadd.f32 %v23, %v30
    %s32 = sld [smem:[#allocation3 + $0x2]]
    %p33 = scmp.gt.s32.totalorder %s32, 0
    %s34 = scalar_select %p33, %s32, 0
    %p35 = scmp.lt.s32.totalorder %s34, 20
    %s36 = scalar_select %p35, %s34, 20
    %s37 = scalar_lea.vmem %s1, %s36
    %v38 = vld [vmem:[%s37] sm:$0x1]
    %v39 = vadd.f32 %v31, %v38
    %s40 = sld [smem:[#allocation3 + $0x3]]
    %p41 = scmp.gt.s32.totalorder %s40, 0
    %s42 = scalar_select %p41, %s40, 0
    %p43 = scmp.lt.s32.totalorder %s42, 20
    %s44 = scalar_select %p43, %s42, 20
    %s45 = scalar_lea.vmem %s1, %s44
    %v46 = vld [vmem:[%s45] sm:$0x1]
    %v47 = vadd.f32 %v39, %v46
    %s48 = sld [smem:[#allocation3 + $0x4]]
    %p49 = scmp.gt.s32.totalorder %s48, 0
    %s50 = scalar_select %p49, %s48, 0
    %p51 = scmp.lt.s32.totalorder %s50, 20
    %s52 = scalar_select %p51, %s50, 20
    %s53 = scalar_lea.vmem %s1, %s52
    %v54 = vld [vmem:[%s53] sm:$0x1]
    %v55 = vadd.f32 %v47, %v54
    %s56 = sld [smem:[#allocation3 + $0x5]]
    %p57 = scmp.gt.s32.totalorder %s56, 0
    %s58 = scalar_select %p57, %s56, 0
    %p59 = scmp.lt.s32.totalorder %s58, 20
    %s60 = scalar_select %p59, %s58, 20
    %s61 = scalar_lea.vmem %s1, %s60
    %v62 = vld [vmem:[%s61] sm:$0x1]
    %v63 = vadd.f32 %v55, %v62
    %s64 = sld [smem:[#allocation3 + $0x6]]
    %p65 = scmp.gt.s32.totalorder %s64, 0
    %s66 = scalar_select %p65, %s64, 0
    %p67 = scmp.lt.s32.totalorder %s66, 20
    %s68 = scalar_select %p67, %s66, 20
    %s69 = scalar_lea.vmem %s1, %s68
    %v70 = vld [vmem:[%s69] sm:$0x1]
    %v71 = vadd.f32 %v63, %v70
    %s72 = sld [smem:[#allocation3 + $0x7]]
    %p73 = scmp.gt.s32.totalorder %s72, 0
    %s74 = scalar_select %p73, %s72, 0
    %p75 = scmp.lt.s32.totalorder %s74, 20
    %s76 = scalar_select %p75, %s74, 20
    %s77 = scalar_lea.vmem %s1, %s76
    %v78 = vld [vmem:[%s77] sm:$0x1]
    %v79 = vadd.f32 %v71, %v78
    %v80 = vmul.f32 %v79, 0.125
    %vm81 = vcmask 8192
    %v82 = vsel %vm81, %v80, -inf
    %83 = vmax.xlane.f32.xlu0 %v82
    %v84 = vpop.xlane.xlu0 %83
    %v85 = vsub.f32 %v80, %v84
    %v86 = vmul.f32 %v85, 1.442695
    %v87 = vpow.pop %v86
    %v88 = vsel %vm81, %v87, 0.0
    %89 = vadd.xlane.f32.xlu0 %v88
    %v90 = vpop.xlane.xlu0 %89
    %v91 = vrcp.pop %v90
    %v92 = vmul.f32 %v87, %v91
    %93 = vst.msk [vmem:[#allocation4] sm:$0x1] %vm81, %v92
    %s94 = sld [smem:[#allocation3 + $0x8]]
    %p95 = scmp.gt.s32.totalorder %s94, 0
    %s96 = scalar_select %p95, %s94, 0
    %p97 = scmp.lt.s32.totalorder %s96, 20
    %s98 = scalar_select %p97, %s96, 20
    %s99 = scalar_lea.vmem %s1, %s98
    %v100 = vld [vmem:[%s99] sm:$0x1]
    %v101 = vadd.f32 %v100, 0.0
    %s102 = sld [smem:[#allocation3 + $0x9]]
    %p103 = scmp.gt.s32.totalorder %s102, 0
    %s104 = scalar_select %p103, %s102, 0
    %p105 = scmp.lt.s32.totalorder %s104, 20
    %s106 = scalar_select %p105, %s104, 20
    %s107 = scalar_lea.vmem %s1, %s106
    %v108 = vld [vmem:[%s107] sm:$0x1]
    %v109 = vadd.f32 %v101, %v108
    %s110 = sld [smem:[#allocation3 + $0xa]]
    %p111 = scmp.gt.s32.totalorder %s110, 0
    %s112 = scalar_select %p111, %s110, 0
    %p113 = scmp.lt.s32.totalorder %s112, 20
    %s114 = scalar_select %p113, %s112, 20
    %s115 = scalar_lea.vmem %s1, %s114
    %v116 = vld [vmem:[%s115] sm:$0x1]
    %v117 = vadd.f32 %v109, %v116
    %s118 = sld [smem:[#allocation3 + $0xb]]
    %p119 = scmp.gt.s32.totalorder %s118, 0
    %s120 = scalar_select %p119, %s118, 0
    %p121 = scmp.lt.s32.totalorder %s120, 20
    %s122 = scalar_select %p121, %s120, 20
    %s123 = scalar_lea.vmem %s1, %s122
    %v124 = vld [vmem:[%s123] sm:$0x1]
    %v125 = vadd.f32 %v117, %v124
    %s126 = sld [smem:[#allocation3 + $0xc]]
    %p127 = scmp.gt.s32.totalorder %s126, 0
    %s128 = scalar_select %p127, %s126, 0
    %p129 = scmp.lt.s32.totalorder %s128, 20
    %s130 = scalar_select %p129, %s128, 20
    %s131 = scalar_lea.vmem %s1, %s130
    %v132 = vld [vmem:[%s131] sm:$0x1]
    %v133 = vadd.f32 %v125, %v132
    %s134 = sld [smem:[#allocation3 + $0xd]]
    %p135 = scmp.gt.s32.totalorder %s134, 0
    %s136 = scalar_select %p135, %s134, 0
    %p137 = scmp.lt.s32.totalorder %s136, 20
    %s138 = scalar_select %p137, %s136, 20
    %s139 = scalar_lea.vmem %s1, %s138
    %v140 = vld [vmem:[%s139] sm:$0x1]
    %v141 = vadd.f32 %v133, %v140
    %s142 = sld [smem:[#allocation3 + $0xe]]
    %p143 = scmp.gt.s32.totalorder %s142, 0
    %s144 = scalar_select %p143, %s142, 0
    %p145 = scmp.lt.s32.totalorder %s144, 20
    %s146 = scalar_select %p145, %s144, 20
    %s147 = scalar_lea.vmem %s1, %s146
    %v148 = vld [vmem:[%s147] sm:$0x1]
    %v149 = vadd.f32 %v141, %v148
    %s150 = sld [smem:[#allocation3 + $0xf]]
    %p151 = scmp.gt.s32.totalorder %s150, 0
    %s152 = scalar_select %p151, %s150, 0
    %p153 = scmp.lt.s32.totalorder %s152, 20
    %s154 = scalar_select %p153, %s152, 20
    %s155 = scalar_lea.vmem %s1, %s154
    %v156 = vld [vmem:[%s155] sm:$0x1]
    %v157 = vadd.f32 %v149, %v156
    %v158 = vmul.f32 %v157, 0.125
    %v159 = vsel %vm81, %v158, -inf
    %160 = vmax.xlane.f32.xlu0 %v159
    %v161 = vpop.xlane.xlu0 %160
    %v162 = vsub.f32 %v158, %v161
    %v163 = vmul.f32 %v162, 1.442695
    %v164 = vpow.pop %v163
    %v165 = vsel %vm81, %v164, 0.0
    %166 = vadd.xlane.f32.xlu0 %v165
    %v167 = vpop.xlane.xlu0 %166
    %v168 = vrcp.pop %v167
    %v169 = vmul.f32 %v164, %v168
    %170 = vst.msk [vmem:[#allocation4 + $0x1] sm:$0x1] %vm81, %v169
    // Predicated region
    $region6: #{tpu_custom_call.1} parent=1 // pred_check
      _
    $region7: #{tpu_custom_call.1} parent=1 // pred_check_branch
      %172 = sbr.rel (0) target = $region9
    $region8: #{tpu_custom_call.1} parent=1 // pred_region
      %s174 = ssub.s32 32, 32
      %175 = vsyncadd [#allocation5], %s174
      %s177 = sshll.u32 [#allocation4], 4
      %s178 = int_to_ptr.vmem [resolvable:$true] %s177
      %180 = dma.vmem_to_hbm [thread:$0]  %s178, 32, %s2, [#allocation5]
    $region9: #{tpu_custom_call.1} parent=1 // pred_fallthru
      _
    // Predicated region
    $region10: #{tpu_custom_call.1} parent=1 // pred_check
      _
    $region11: #{tpu_custom_call.1} parent=1 // pred_check_branch
      %182 = sbr.rel (0) target = $region13
    $region12: #{tpu_custom_call.1} parent=1 // pred_region
      %183 = dma.done [#allocation5], 32
    $region13: #{tpu_custom_call.1} parent=1 // pred_fallthru
      _
    %184 = vsyncpa [#allocation5], 1

</llo_original>
